<compile_context>
chip_gen: v5e
topology: v5e:2x2
jax: 0.10.0
libtpu: 0.0.40
codegen_flags: <defaults>
</compile_context>

<pallas_src>
import jax
import jax.numpy as jnp
from jax.experimental import pallas as pl
from jax.experimental.pallas import tpu as pltpu

# Split into a few concurrent DMAs only when the copy is big enough for the
# overlap to matter; below this a single descriptor already saturates HBM.
_CHUNK_THRESHOLD_BYTES = 1 << 20   # 1 MiB
_MAX_DMA_CHUNKS = 4


def _chunk_bounds(leading: int, total_bytes: int):
    """Static (start, size) chunks along the leading axis."""
    if total_bytes < _CHUNK_THRESHOLD_BYTES or leading < 2:
        return [(0, leading)]
    n_chunks = min(_MAX_DMA_CHUNKS, leading)
    base, rem = divmod(leading, n_chunks)
    bounds, start = [], 0
    for c in range(n_chunks):
        size = base + (1 if c < rem else 0)
        bounds.append((start, size))
        start += size
    return bounds


def _make_copy_kernel(chunks):
    """HBM->HBM DMA copy kernel (no VMEM staging, no grid)."""
    n_chunks = len(chunks)

    def kernel(x_hbm, o_hbm, sems):
        if n_chunks == 1:
            cp = pltpu.make_async_copy(x_hbm, o_hbm, sems.at[0])
            cp.start()
            cp.wait()
            return
        # Issue all chunk DMAs first (concurrent engines), then wait on all.
        descs = []
        for c, (start, size) in enumerate(chunks):
            cp = pltpu.make_async_copy(
                x_hbm.at[pl.ds(start, size)],
                o_hbm.at[pl.ds(start, size)],
                sems.at[c],
            )
            cp.start()
            descs.append(cp)
        for cp in descs:
            cp.wait()

    return kernel


def _identity_pallas_copy(x: jax.Array) -> jax.Array:
    """Materialized identity: bit-identical copy via a direct HBM->HBM DMA."""
    if x.size == 0:
        return x

    orig_ndim = x.ndim
    xr = x.reshape((1,)) if orig_ndim == 0 else x

    itemsize = jnp.dtype(xr.dtype).itemsize
    total_bytes = xr.size * itemsize
    chunks = _chunk_bounds(xr.shape[0], total_bytes)

    out = pl.pallas_call(
        _make_copy_kernel(chunks),
        out_shape=jax.ShapeDtypeStruct(xr.shape, xr.dtype),
        in_specs=[pl.BlockSpec(memory_space=pl.ANY)],
        out_specs=pl.BlockSpec(memory_space=pl.ANY),
        scratch_shapes=[pltpu.SemaphoreType.DMA((len(chunks),))],
        cost_estimate=pl.CostEstimate(
            flops=0, transcendentals=0, bytes_accessed=2 * total_bytes),
    )(xr)

    return out.reshape(()) if orig_ndim == 0 else out


def identity(x: jax.Array, *, materialize: bool = False) -> jax.Array:
    """Identity forward pass.

    materialize=False (default): returns `x` unchanged — zero HBM traffic,
    which is the correct cost model for nn.Identity.
    materialize=True: produces a fresh, bit-identical copy via a direct
    HBM->HBM DMA Pallas kernel (no VMEM staging, no grid overhead).
    """
    if not materialize:
        return x
    return _identity_pallas_copy(x)


if __name__ == "__main__":
    key = jax.random.PRNGKey(0)
    x = jax.random.normal(key, (2, 4, 16, 16), dtype=jnp.float32)

    # Zero-cost path (the right answer for Identity): no kernel at all.
    y_fast = identity(x)
    assert y_fast is x

    # Direct-DMA copy path (single-chunk: 8 KiB).
    y = identity(x, materialize=True)
    jax.block_until_ready(y)
    assert y.shape == x.shape and y.dtype == x.dtype
    assert bool(jnp.all(y == x))

    # Non-128-divisible shape: a DMA is just bytes, no (8,128) constraints.
    x_odd = jax.random.normal(jax.random.PRNGKey(0), (3, 5, 7), dtype=jnp.float32)
    y_odd = identity(x_odd, materialize=True)
    jax.block_until_ready(y_odd)
    assert y_odd.shape == x_odd.shape
    assert bool(jnp.all(y_odd == x_odd))

    # Larger tensor (4 MiB) to exercise the multi-chunk concurrent-DMA path.
    x_big = jax.random.normal(jax.random.PRNGKey(0), (16, 256, 256),
                              dtype=jnp.float32)
    y_big = identity(x_big, materialize=True)
    jax.block_until_ready(y_big)
    assert y_big.shape == x_big.shape
    assert bool(jnp.all(y_big == x_big))

    print("KERNEL_OK")
</pallas_src>

<mosaic_0001>
module attributes {stable_mosaic.version = 11 : i64} {
  func.func @kernel(%arg0: memref<2x4x16x16xf32, #tpu.memory_space<any>>, %arg1: memref<2x4x16x16xf32, #tpu.memory_space<any>>, %arg2: memref<1x!tpu.dma_semaphore, #tpu.memory_space<semaphore_mem>>) attributes {dimension_semantics = [], scalar_prefetch = 0 : i64, scratch_operands = 1 : i64, tpu.core_type = #tpu.core_type<tc>} {
    %c0_i32 = arith.constant 0 : i32
    %0 = tpu.memref_slice %arg2[%c0_i32] : memref<1x!tpu.dma_semaphore, #tpu.memory_space<semaphore_mem>> -> memref<1x!tpu.dma_semaphore, #tpu.memory_space<semaphore_mem>>
    %1 = tpu.memref_squeeze %0 : memref<1x!tpu.dma_semaphore, #tpu.memory_space<semaphore_mem>> -> memref<!tpu.dma_semaphore, #tpu.memory_space<semaphore_mem>>
    tpu.enqueue_dma source(%arg0 : memref<2x4x16x16xf32, #tpu.memory_space<any>>) target(%arg1 : memref<2x4x16x16xf32, #tpu.memory_space<any>>) target_semaphore(%1 : memref<!tpu.dma_semaphore, #tpu.memory_space<semaphore_mem>>)
    %c0_i32_0 = arith.constant 0 : i32
    %2 = tpu.memref_slice %arg2[%c0_i32_0] : memref<1x!tpu.dma_semaphore, #tpu.memory_space<semaphore_mem>> -> memref<1x!tpu.dma_semaphore, #tpu.memory_space<semaphore_mem>>
    %3 = tpu.memref_squeeze %2 : memref<1x!tpu.dma_semaphore, #tpu.memory_space<semaphore_mem>> -> memref<!tpu.dma_semaphore, #tpu.memory_space<semaphore_mem>>
    tpu.wait_dma2 semaphore(%3 : memref<!tpu.dma_semaphore, #tpu.memory_space<semaphore_mem>>) src(%arg0 : memref<2x4x16x16xf32, #tpu.memory_space<any>>) dst(%arg1 : memref<2x4x16x16xf32, #tpu.memory_space<any>>)
    return
  }
}

</mosaic_0001>

<llo_original>
// kernel: tpu_custom_call.1
$region0: #{tpu_custom_call.1}
  #allocation0 [shape = 'u32[]', space=smem, size = 0x4, offset = 0x4, fixed_abs, tag = 'smem constant byte address 0x4 - core index']
  #allocation1 [shape = 'u32[72,128]{1,0:T(1,128)}', space=vmem, size = 0x9000, scoped, tag = 'internal scratch']
  #allocation2 [shape = 's32[1]{0}', space=sflag, size = 0x4, scoped, tag = 'scratch operand']
  #allocation3 [shape = 's32[]', space=sflag, size = 0x4, offset = 0, fixed_abs, tag = 'sflag constant byte address 0x0 - dummy sync flag']
  #allocation4 [shape = 'u32[0]{0}', space=smem, size = 0, offset = 0, fixed_abs, tag = 'smem constant byte address 0x0 - null']
  %s0 = inlined_call_operand.hbm [shape: f32[2,4,16,16], index: 0, kind: input, shape index: {}]
  %s1 = inlined_call_operand.hbm [shape: f32[2,4,16,16], index: 1, kind: output, shape index: {}]
  %s2 = sld [smem:[#allocation0]]
  $region2: #{tpu_custom_call.1} parent=0
    _
  %s4 = ssub.s32 1, %s2
  %s5 = scalar_select 0, %s4, %s2
  %s7 = sshll.u32 1, 14
  %s8 = sxor.u32 4294967295, %s7
  %s10 = sshll.u32 %s0, 4
  %s11 = int_to_ptr.hbm [resolvable:$true] %s10
  %s12 = sshll.u32 %s1, 4
  %s13 = int_to_ptr.hbm [resolvable:$true] %s12
  %16 = dma.general %s11, 2048, %s13, [#allocation2], [#allocation3], [#allocation4], 0, 0
  %s17 = smul.u32 2, 4
  %s18 = smul.u32 %s17, 16
  %s19 = smul.u32 %s18, 1
  %s20 = sshll.u32 %s19, 4
  %21 = dma.done [#allocation2], %s20
  %22 = vsyncmov [#allocation2]
  %s23 = vpop.sfrf %22
  %p24 = scmp.eq.s32.totalorder %s23, 0
  %p25 = pneg %p24
  %27 = shalt.err (%p25)

</llo_original>
